<compile_context>
chip_gen: v7x
topology: tpu7x:2x2x1
jax: 0.10.0
libtpu: 0.0.40
codegen_flags: <defaults>
</compile_context>

<pallas_src>
import jax
import jax.numpy as jnp
from jax.experimental import pallas as pl
from jax.experimental.pallas import tpu as pltpu

_LANE = 128
_SUB = 8


def _round_up(x, m):
    return -(-x // m) * m


def _mixture_kernel(mu_ref, coef_ref, const_ref, x_ref, o_ref):
    # mu_ref:    (D,)            SMEM f32
    # coef_ref:  (D*(D+1)//2,)   SMEM f32  upper-tri of -0.5*inv(sigma),
    #                                      off-diagonals already doubled
    # const_ref: (1,)            SMEM f32  log(phi) - 0.5*(D*log(2*pi)+logdet)
    # x_ref:     (D, TM, 128)    VMEM      samples dense on sublane+lane axes
    # o_ref:     (TM, 128)       VMEM      lane/sublane-dense output
    D = x_ref.shape[0]

    # diff_d = x_d - mu_d, one full (TM, 128) tile per feature; cast to f32
    # lazily per feature (no whole-block f32 copy is materialized).
    diffs = [x_ref[d].astype(jnp.float32) - mu_ref[d] for d in range(D)]

    # -0.5 * diff^T inv(sigma) diff  ==  sum_{d<=e} c_de * diff_d * diff_e
    acc = None
    idx = 0
    for d in range(D):
        t = diffs[d] * coef_ref[idx]
        idx += 1
        for e in range(d + 1, D):
            t = t + diffs[e] * coef_ref[idx]
            idx += 1
        contrib = diffs[d] * t
        acc = contrib if acc is None else acc + contrib

    o_ref[...] = (acc + const_ref[0]).astype(o_ref.dtype)


def mixture_forward(X, mu, inv_sigma, const, *, tile_n=131072):
    """const = log(phi) - log_sqrt_den (scalar). Returns (N, 1) float32."""
    N, D = X.shape
    itemsize = jnp.dtype(X.dtype).itemsize

    # ---- lane/sublane-dense sample layout: (D, M, 128) ----------------------
    # Pad N so the sample axis tiles into full (8, 128) vregs; padded samples
    # compute finite garbage that is cropped off below.
    if N <= _SUB * _LANE:
        N_pad = _round_up(N, _LANE)
    else:
        N_pad = _round_up(N, _SUB * _LANE)
    M_total = N_pad // _LANE

    Xt = jnp.transpose(X)                                    # (D, N)
    Xt = jnp.pad(Xt, ((0, 0), (0, N_pad - N)))
    X3 = Xt.reshape(D, M_total, _LANE)                       # free reshape

    # ---- scalar parameters (SMEM) -------------------------------------------
    mu_s = jnp.asarray(mu, jnp.float32).reshape(D)
    inv = jnp.asarray(inv_sigma, jnp.float32).reshape(D, D)
    inv = 0.5 * (inv + inv.T)                                # symmetrize
    coefs = []
    for d in range(D):
        for e in range(d, D):
            scale = -0.5 if e == d else -1.0                 # fold the -0.5
            coefs.append(scale * inv[d, e])
    coef_s = jnp.stack(coefs)                                # (D*(D+1)//2,)
    const_s = jnp.asarray(const, jnp.float32).reshape(1)

    # ---- tile selection ------------------------------------------------------
    max_tile_m = max(_SUB, (tile_n // _LANE) // _SUB * _SUB)
    if M_total <= _SUB:
        tile_m = M_total                  # single block == full dim (legal)
    else:                                 # M_total is a multiple of 8 here
        tile_m = min(max_tile_m, M_total)
        if pl.cdiv(M_total, tile_m) < 2:
            # Split so the "parallel" grid axis has >= 2 steps (v7x megacore).
            tile_m = _round_up(-(-M_total // 2), _SUB)
    grid = (pl.cdiv(M_total, tile_m),)

    # VMEM budget: double-buffered input + output blocks + f32 temporaries,
    # capped below v7x's 64 MiB-per-TensorCore VMEM.
    vmem_bytes = (2 * D * tile_m * _LANE * itemsize          # X double-buffer
                  + 2 * tile_m * _LANE * 4                   # out double-buffer
                  + (D + 3) * tile_m * _LANE * 4             # diffs / t / acc
                  + (8 << 20))                               # headroom
    vmem_bytes = min(int(vmem_bytes), 48 << 20)

    out = pl.pallas_call(
        _mixture_kernel,
        grid=grid,
        out_shape=jax.ShapeDtypeStruct((M_total, _LANE), jnp.float32),
        in_specs=[
            pl.BlockSpec(memory_space=pltpu.MemorySpace.SMEM),    # mu
            pl.BlockSpec(memory_space=pltpu.MemorySpace.SMEM),    # coeffs
            pl.BlockSpec(memory_space=pltpu.MemorySpace.SMEM),    # const
            pl.BlockSpec((D, tile_m, _LANE), lambda i: (0, i, 0)),  # X tile
        ],
        out_specs=pl.BlockSpec((tile_m, _LANE), lambda i: (i, 0)),
        compiler_params=pltpu.CompilerParams(
            dimension_semantics=("parallel",),
            vmem_limit_bytes=vmem_bytes),
        cost_estimate=pl.CostEstimate(
            flops=int(N_pad * (D * (D + 1) + 2 * D + 1)),
            transcendentals=0,
            bytes_accessed=int(N_pad * D * itemsize + N_pad * 4),
        ),
    )(mu_s, coef_s, const_s, X3)

    return out.reshape(-1)[:N].reshape(N, 1)


def _reference(X, mu, sigma, phi):
    inv_sigma = jnp.linalg.pinv(sigma)
    _, logdet = jnp.linalg.slogdet(sigma)
    D = X.shape[1]
    log_two_pi_dims = D * (jnp.log(2.0) + jnp.log(jnp.pi))
    log_sqrt_den = 0.5 * (log_two_pi_dims + logdet)
    diff = X - mu[None, :]
    quad = jnp.einsum("nd,de,ne->n", diff, inv_sigma, diff)
    ll = -0.5 * quad - log_sqrt_den
    return (jnp.log(phi[0]) + ll)[:, None]


def _glue_const(sigma, phi, dims):
    inv_sigma = jnp.linalg.pinv(sigma)
    _, logdet = jnp.linalg.slogdet(sigma)
    log_two_pi_dims = dims * (jnp.log(2.0) + jnp.log(jnp.pi))
    log_sqrt_den = 0.5 * (log_two_pi_dims + logdet)
    const = jnp.log(phi[0]) - log_sqrt_den
    return inv_sigma, const


if __name__ == "__main__":
    key = jax.random.PRNGKey(0)
    k_mu, k_x, k_x2, k_x3, k_sig = jax.random.split(key, 5)

    dims = 4       # feature dimension of the Gaussian
    n_samples = 8  # number of samples in X

    # Deterministic parameter init mirroring _Mixture.__init__:
    mu = (jax.random.uniform(k_mu, (dims,), dtype=jnp.float32) - 0.5) * 2.0
    sigma = jnp.eye(dims, dtype=jnp.float32)
    phi = jnp.ones((1,), dtype=jnp.float32)

    X = jax.random.normal(k_x, (n_samples, dims), dtype=jnp.float32)

    inv_sigma, const = _glue_const(sigma, phi, dims)
    fwd = jax.jit(mixture_forward, static_argnames=("tile_n",))

    # 1) Small case: single block (grid = 1), lane-padded 8 -> 128 samples.
    out = jax.block_until_ready(fwd(X, mu, inv_sigma, const))
    ref = _reference(X, mu, sigma, phi)
    assert out.shape == (n_samples, 1)
    assert jnp.allclose(out, ref, atol=1e-5, rtol=1e-5)

    # 2) Gridded case: forced small tile -> grid = 2, padded samples cropped.
    X2 = jax.random.normal(k_x2, (1200, dims), dtype=jnp.float32)
    out2 = jax.block_until_ready(fwd(X2, mu, inv_sigma, const, tile_n=1024))
    ref2 = _reference(X2, mu, sigma, phi)
    assert out2.shape == (1200, 1)
    assert jnp.allclose(out2, ref2, atol=1e-5, rtol=1e-5)

    # 3) Default tile path: >=2-parallel-step split, ragged last block, and a
    #    non-identity SPD sigma to exercise the off-diagonal coefficients.
    A = jax.random.normal(k_sig, (dims, dims), dtype=jnp.float32)
    sigma3 = A @ A.T + dims * jnp.eye(dims, dtype=jnp.float32)
    inv_sigma3, const3 = _glue_const(sigma3, phi, dims)
    X3 = jax.random.normal(k_x3, (3000, dims), dtype=jnp.float32)
    out3 = jax.block_until_ready(fwd(X3, mu, inv_sigma3, const3))
    ref3 = _reference(X3, mu, sigma3, phi)
    assert out3.shape == (3000, 1)
    assert jnp.allclose(out3, ref3, atol=1e-4, rtol=1e-4)

    print("KERNEL_OK")
</pallas_src>

<mosaic_0001>
module attributes {stable_mosaic.version = 11 : i64} {
  func.func @_mixture_kernel(%arg0: i32, %arg1: memref<4xf32, #tpu.memory_space<smem>>, %arg2: memref<10xf32, #tpu.memory_space<smem>>, %arg3: memref<1xf32, #tpu.memory_space<smem>>, %arg4: memref<4x1x128xf32, #tpu.memory_space<vmem>>, %arg5: memref<1x128xf32, #tpu.memory_space<vmem>>) attributes {dimension_semantics = [#tpu.dimension_semantics<parallel>], iteration_bounds = array<i64: 1>, scalar_prefetch = 0 : i64, scratch_operands = 0 : i64, tpu.core_type = #tpu.core_type<tc>, window_params = [{transform_indices = @transform_0, window_bounds = array<i64: 4>}, {transform_indices = @transform_1, window_bounds = array<i64: 10>}, {transform_indices = @transform_2, window_bounds = array<i64: 1>}, {transform_indices = @transform_3, window_bounds = array<i64: 4, 1, 128>}, {transform_indices = @transform_4, window_bounds = array<i64: 1, 128>}]} {
    %c0 = arith.constant 0 : index
    %c0_0 = arith.constant 0 : index
    %c0_1 = arith.constant 0 : index
    %0 = vector.load %arg4[%c0, %c0_0, %c0_1] : memref<4x1x128xf32, #tpu.memory_space<vmem>>, vector<1x1x128xf32>
    %1 = vector.shape_cast %0 : vector<1x1x128xf32> to vector<1x128xf32>
    %c0_2 = arith.constant 0 : index
    %2 = memref.load %arg1[%c0_2] : memref<4xf32, #tpu.memory_space<smem>>
    %3 = vector.broadcast %2 : f32 to vector<1x128xf32>
    %4 = arith.subf %1, %3 : vector<1x128xf32>
    %c1 = arith.constant 1 : index
    %c0_3 = arith.constant 0 : index
    %c0_4 = arith.constant 0 : index
    %5 = vector.load %arg4[%c1, %c0_3, %c0_4] : memref<4x1x128xf32, #tpu.memory_space<vmem>>, vector<1x1x128xf32>
    %6 = vector.shape_cast %5 : vector<1x1x128xf32> to vector<1x128xf32>
    %c1_5 = arith.constant 1 : index
    %7 = memref.load %arg1[%c1_5] : memref<4xf32, #tpu.memory_space<smem>>
    %8 = vector.broadcast %7 : f32 to vector<1x128xf32>
    %9 = arith.subf %6, %8 : vector<1x128xf32>
    %c2 = arith.constant 2 : index
    %c0_6 = arith.constant 0 : index
    %c0_7 = arith.constant 0 : index
    %10 = vector.load %arg4[%c2, %c0_6, %c0_7] : memref<4x1x128xf32, #tpu.memory_space<vmem>>, vector<1x1x128xf32>
    %11 = vector.shape_cast %10 : vector<1x1x128xf32> to vector<1x128xf32>
    %c2_8 = arith.constant 2 : index
    %12 = memref.load %arg1[%c2_8] : memref<4xf32, #tpu.memory_space<smem>>
    %13 = vector.broadcast %12 : f32 to vector<1x128xf32>
    %14 = arith.subf %11, %13 : vector<1x128xf32>
    %c3 = arith.constant 3 : index
    %c0_9 = arith.constant 0 : index
    %c0_10 = arith.constant 0 : index
    %15 = vector.load %arg4[%c3, %c0_9, %c0_10] : memref<4x1x128xf32, #tpu.memory_space<vmem>>, vector<1x1x128xf32>
    %16 = vector.shape_cast %15 : vector<1x1x128xf32> to vector<1x128xf32>
    %c3_11 = arith.constant 3 : index
    %17 = memref.load %arg1[%c3_11] : memref<4xf32, #tpu.memory_space<smem>>
    %18 = vector.broadcast %17 : f32 to vector<1x128xf32>
    %19 = arith.subf %16, %18 : vector<1x128xf32>
    %c0_12 = arith.constant 0 : index
    %20 = memref.load %arg2[%c0_12] : memref<10xf32, #tpu.memory_space<smem>>
    %21 = vector.broadcast %20 : f32 to vector<1x128xf32>
    %22 = arith.mulf %4, %21 : vector<1x128xf32>
    %c1_13 = arith.constant 1 : index
    %23 = memref.load %arg2[%c1_13] : memref<10xf32, #tpu.memory_space<smem>>
    %24 = vector.broadcast %23 : f32 to vector<1x128xf32>
    %25 = arith.mulf %9, %24 : vector<1x128xf32>
    %26 = arith.addf %22, %25 : vector<1x128xf32>
    %c2_14 = arith.constant 2 : index
    %27 = memref.load %arg2[%c2_14] : memref<10xf32, #tpu.memory_space<smem>>
    %28 = vector.broadcast %27 : f32 to vector<1x128xf32>
    %29 = arith.mulf %14, %28 : vector<1x128xf32>
    %30 = arith.addf %26, %29 : vector<1x128xf32>
    %c3_15 = arith.constant 3 : index
    %31 = memref.load %arg2[%c3_15] : memref<10xf32, #tpu.memory_space<smem>>
    %32 = vector.broadcast %31 : f32 to vector<1x128xf32>
    %33 = arith.mulf %19, %32 : vector<1x128xf32>
    %34 = arith.addf %30, %33 : vector<1x128xf32>
    %35 = arith.mulf %4, %34 : vector<1x128xf32>
    %c4 = arith.constant 4 : index
    %36 = memref.load %arg2[%c4] : memref<10xf32, #tpu.memory_space<smem>>
    %37 = vector.broadcast %36 : f32 to vector<1x128xf32>
    %38 = arith.mulf %9, %37 : vector<1x128xf32>
    %c5 = arith.constant 5 : index
    %39 = memref.load %arg2[%c5] : memref<10xf32, #tpu.memory_space<smem>>
    %40 = vector.broadcast %39 : f32 to vector<1x128xf32>
    %41 = arith.mulf %14, %40 : vector<1x128xf32>
    %42 = arith.addf %38, %41 : vector<1x128xf32>
    %c6 = arith.constant 6 : index
    %43 = memref.load %arg2[%c6] : memref<10xf32, #tpu.memory_space<smem>>
    %44 = vector.broadcast %43 : f32 to vector<1x128xf32>
    %45 = arith.mulf %19, %44 : vector<1x128xf32>
    %46 = arith.addf %42, %45 : vector<1x128xf32>
    %47 = arith.mulf %9, %46 : vector<1x128xf32>
    %48 = arith.addf %35, %47 : vector<1x128xf32>
    %c7 = arith.constant 7 : index
    %49 = memref.load %arg2[%c7] : memref<10xf32, #tpu.memory_space<smem>>
    %50 = vector.broadcast %49 : f32 to vector<1x128xf32>
    %51 = arith.mulf %14, %50 : vector<1x128xf32>
    %c8 = arith.constant 8 : index
    %52 = memref.load %arg2[%c8] : memref<10xf32, #tpu.memory_space<smem>>
    %53 = vector.broadcast %52 : f32 to vector<1x128xf32>
    %54 = arith.mulf %19, %53 : vector<1x128xf32>
    %55 = arith.addf %51, %54 : vector<1x128xf32>
    %56 = arith.mulf %14, %55 : vector<1x128xf32>
    %57 = arith.addf %48, %56 : vector<1x128xf32>
    %c9 = arith.constant 9 : index
    %58 = memref.load %arg2[%c9] : memref<10xf32, #tpu.memory_space<smem>>
    %59 = vector.broadcast %58 : f32 to vector<1x128xf32>
    %60 = arith.mulf %19, %59 : vector<1x128xf32>
    %61 = arith.mulf %19, %60 : vector<1x128xf32>
    %62 = arith.addf %57, %61 : vector<1x128xf32>
    %c0_16 = arith.constant 0 : index
    %63 = memref.load %arg3[%c0_16] : memref<1xf32, #tpu.memory_space<smem>>
    %64 = vector.broadcast %63 : f32 to vector<1x128xf32>
    %65 = arith.addf %62, %64 : vector<1x128xf32>
    %c0_17 = arith.constant 0 : index
    %c0_18 = arith.constant 0 : index
    %66 = vector.load %arg5[%c0_17, %c0_18] : memref<1x128xf32, #tpu.memory_space<vmem>>, vector<1x128xf32>
    tpu.vector_store %arg5[%c0_17, %c0_18], %65 {strides = array<i32>} : memref<1x128xf32, #tpu.memory_space<vmem>>, vector<1x128xf32>,
    return
  }
  func.func @transform_0(%arg0: i32) -> i32 {
    %c0_i32 = arith.constant 0 : i32
    %c0_i32_0 = arith.constant 0 : i32
    return %c0_i32 : i32
  }
  func.func @transform_1(%arg0: i32) -> i32 {
    %c0_i32 = arith.constant 0 : i32
    %c0_i32_0 = arith.constant 0 : i32
    return %c0_i32 : i32
  }
  func.func @transform_2(%arg0: i32) -> i32 {
    %c0_i32 = arith.constant 0 : i32
    %c0_i32_0 = arith.constant 0 : i32
    return %c0_i32 : i32
  }
  func.func @transform_3(%arg0: i32) -> (i32, i32, i32) {
    %c0_i32 = arith.constant 0 : i32
    %c0_i32_0 = arith.constant 0 : i32
    %c0_i32_1 = arith.constant 0 : i32
    return %c0_i32, %arg0, %c0_i32_0 : i32, i32, i32
  }
  func.func @transform_4(%arg0: i32) -> (i32, i32) {
    %c0_i32 = arith.constant 0 : i32
    %c0_i32_0 = arith.constant 0 : i32
    return %arg0, %c0_i32 : i32, i32
  }
}

</mosaic_0001>

<llo_original>
// kernel: mixture_forward.1
$region0: #{mixture_forward.1}
  #allocation0 [shape = 'u32[]', space=smem, size = 0x4, offset = 0x4, fixed_abs, tag = 'smem constant byte address 0x4 - core index']
  #allocation1 [shape = 'u32[144,128]{1,0:T(1,128)}', space=vmem, size = 0x12000, scoped, tag = 'internal scratch']
  #allocation2 [shape = 'f32[1]{0:T(128)S(6)}', space=smem, size = 0x200, scoped, tag = 'scoped memory for mixture_forward.1']
  %s0 = inlined_call_operand.vmem [shape: f32[4], index: 0, kind: input, shape index: {}]
  %s1 = inlined_call_operand.vmem [shape: f32[10], index: 1, kind: input, shape index: {}]
  %s2 = inlined_call_operand.<no memory space> [shape: f32[1], index: 2, kind: input, shape index: {}]
  %s3 = inlined_call_operand.vmem [shape: f32[4,1,128], index: 3, kind: input, shape index: {}]
  %s4 = inlined_call_operand.vmem [shape: f32[1,128], index: 4, kind: output, shape index: {}]
  %s5 = sld [smem:[#allocation0]]
  $region34: #{mixture_forward.1} parent=0
    _
  %s7 = ssub.s32 1, %s5
  %s8 = scalar_select 0, %s7, %s5
  %9 = sst [smem:[#allocation2]] %s2
  $region1: #{mixture_forward.1} parent=0
    #allocation3 [shape = 'u8[512]{0}', space=smem, size = 0x200, scoped, tag = 'input window, operand 0, single buffered']
    #allocation4 [shape = 's32[1]{0}', space=sflag, size = 0x4, scoped, tag = 'scoped memory for mixture_forward.1']
    #allocation5 [shape = 'u8[512]{0}', space=smem, size = 0x200, scoped, tag = 'input window, operand 1, single buffered']
    #allocation6 [shape = 's32[1]{0}', space=sflag, size = 0x4, scoped, tag = 'scoped memory for mixture_forward.1']
    %10 = vsyncpa [#allocation4], 0
    %11 = vsyncpa [#allocation6], 0
    // Predicated region
    $region2: #{mixture_forward.1} parent=1 // pred_check
      _
    $region3: #{mixture_forward.1} parent=1 // pred_check_branch
      %13 = sbr.rel (0) target = $region5
    $region4: #{mixture_forward.1} parent=1 // pred_region
      %s15 = ssub.s32 16, 16
      %16 = vsyncadd [#allocation4], %s15
      %s18 = sshll.u32 %s0, 4
      %s19 = int_to_ptr.vmem [resolvable:$true] %s18
      %21 = dma.vmem_to_smem %s19, 16, [#allocation3], [#allocation4]
    $region5: #{mixture_forward.1} parent=1 // pred_fallthru
      _
    // Predicated region
    $region6: #{mixture_forward.1} parent=1 // pred_check
      _
    $region7: #{mixture_forward.1} parent=1 // pred_check_branch
      %23 = sbr.rel (0) target = $region9
    $region8: #{mixture_forward.1} parent=1 // pred_region
      %s25 = ssub.s32 16, 16
      %26 = vsyncadd [#allocation6], %s25
      %s28 = sshll.u32 %s1, 4
      %s29 = int_to_ptr.vmem [resolvable:$true] %s28
      %31 = dma.vmem_to_smem %s29, 16, [#allocation5], [#allocation6]
    $region9: #{mixture_forward.1} parent=1 // pred_fallthru
      _
    // Predicated region
    $region10: #{mixture_forward.1} parent=1 // pred_check
      _
    $region11: #{mixture_forward.1} parent=1 // pred_check_branch
      %33 = sbr.rel (0) target = $region13
    $region12: #{mixture_forward.1} parent=1 // pred_region
      _
    $region13: #{mixture_forward.1} parent=1 // pred_fallthru
      _
    // Predicated region
    $region14: #{mixture_forward.1} parent=1 // pred_check
      _
    $region15: #{mixture_forward.1} parent=1 // pred_check_branch
      %35 = sbr.rel (0) target = $region17
    $region16: #{mixture_forward.1} parent=1 // pred_region
      _
    $region17: #{mixture_forward.1} parent=1 // pred_fallthru
      _
    // Predicated region
    $region18: #{mixture_forward.1} parent=1 // pred_check
      _
    $region19: #{mixture_forward.1} parent=1 // pred_check_branch
      %37 = sbr.rel (0) target = $region21
    $region20: #{mixture_forward.1} parent=1 // pred_region
      %38 = dma.done [#allocation4], 16
    $region21: #{mixture_forward.1} parent=1 // pred_fallthru
      _
    // Predicated region
    $region22: #{mixture_forward.1} parent=1 // pred_check
      _
    $region23: #{mixture_forward.1} parent=1 // pred_check_branch
      %40 = sbr.rel (0) target = $region25
    $region24: #{mixture_forward.1} parent=1 // pred_region
      %41 = dma.done [#allocation6], 16
    $region25: #{mixture_forward.1} parent=1 // pred_fallthru
      _
    %42 = sfence
    %v43 = vld [vmem:[%s3] sm:$0x1]
    %s44 = sld [smem:[#allocation3]]
    %v45 = vstv %s44
    %v46 = vsub.f32 %v43, %v45
    %s47 = scalar_lea.vmem %s3, 1
    %v48 = vld [vmem:[%s47] sm:$0x1]
    %s49 = sld [smem:[#allocation3 + $0x1]]
    %v50 = vstv %s49
    %v51 = vsub.f32 %v48, %v50
    %s52 = scalar_lea.vmem %s3, 2
    %v53 = vld [vmem:[%s52] sm:$0x1]
    %s54 = sld [smem:[#allocation3 + $0x2]]
    %v55 = vstv %s54
    %v56 = vsub.f32 %v53, %v55
    %s57 = scalar_lea.vmem %s3, 3
    %v58 = vld [vmem:[%s57] sm:$0x1]
    %s59 = sld [smem:[#allocation3 + $0x3]]
    %v60 = vstv %s59
    %v61 = vsub.f32 %v58, %v60
    %s62 = sld [smem:[#allocation5]]
    %v63 = vstv %s62
    %v64 = vmul.f32 %v46, %v63
    %s65 = sld [smem:[#allocation5 + $0x1]]
    %v66 = vstv %s65
    %v67 = vmul.f32 %v51, %v66
    %v68 = vadd.f32 %v64, %v67
    %s69 = sld [smem:[#allocation5 + $0x2]]
    %v70 = vstv %s69
    %v71 = vmul.f32 %v56, %v70
    %v72 = vadd.f32 %v68, %v71
    %s73 = sld [smem:[#allocation5 + $0x3]]
    %v74 = vstv %s73
    %v75 = vmul.f32 %v61, %v74
    %v76 = vadd.f32 %v72, %v75
    %v77 = vmul.f32 %v46, %v76
    %s78 = sld [smem:[#allocation5 + $0x4]]
    %v79 = vstv %s78
    %v80 = vmul.f32 %v51, %v79
    %s81 = sld [smem:[#allocation5 + $0x5]]
    %v82 = vstv %s81
    %v83 = vmul.f32 %v56, %v82
    %v84 = vadd.f32 %v80, %v83
    %s85 = sld [smem:[#allocation5 + $0x6]]
    %v86 = vstv %s85
    %v87 = vmul.f32 %v61, %v86
    %v88 = vadd.f32 %v84, %v87
    %v89 = vmul.f32 %v51, %v88
    %v90 = vadd.f32 %v77, %v89
    %s91 = sld [smem:[#allocation5 + $0x7]]
    %v92 = vstv %s91
    %v93 = vmul.f32 %v56, %v92
    %s94 = sld [smem:[#allocation5 + $0x8]]
    %v95 = vstv %s94
    %v96 = vmul.f32 %v61, %v95
    %v97 = vadd.f32 %v93, %v96
    %v98 = vmul.f32 %v56, %v97
    %v99 = vadd.f32 %v90, %v98
    %s100 = sld [smem:[#allocation5 + $0x9]]
    %v101 = vstv %s100
    %v102 = vmul.f32 %v61, %v101
    %v103 = vmul.f32 %v61, %v102
    %v104 = vadd.f32 %v99, %v103
    %s105 = sld [smem:[#allocation2]]
    %v106 = vstv %s105
    %v107 = vadd.f32 %v104, %v106
    %108 = vst [vmem:[%s4] sm:$0x1] %v107
    // Predicated region
    $region26: #{mixture_forward.1} parent=1 // pred_check
      _
    $region27: #{mixture_forward.1} parent=1 // pred_check_branch
      %110 = sbr.rel (0) target = $region29
    $region28: #{mixture_forward.1} parent=1 // pred_region
      _
    $region29: #{mixture_forward.1} parent=1 // pred_fallthru
      _
    // Predicated region
    $region30: #{mixture_forward.1} parent=1 // pred_check
      _
    $region31: #{mixture_forward.1} parent=1 // pred_check_branch
      %112 = sbr.rel (0) target = $region33
    $region32: #{mixture_forward.1} parent=1 // pred_region
      _
    $region33: #{mixture_forward.1} parent=1 // pred_fallthru
      _
    %113 = vsyncpa [#allocation4], 1
    %114 = vsyncpa [#allocation6], 1

</llo_original>
